<compile_context>
chip_gen: v7x
topology: tpu7x:2x2x1
jax: 0.10.0
libtpu: 0.0.40
codegen_flags: <defaults>
</compile_context>

<pallas_src>
import math

import jax
import jax.numpy as jnp
from jax.experimental import pallas as pl
from jax.experimental.pallas import tpu as pltpu


def _scale_kernel(scale_ref, x_ref, o_ref):
    # scale_ref: (1, L), x_ref / o_ref: (tm, L) -> VPU broadcast multiply.
    o_ref[...] = (x_ref[...] * scale_ref[...]).astype(o_ref.dtype)


def _round_up(a, b):
    return ((a + b - 1) // b) * b


def _default_tile_bytes():
    # v7x HBM (~3.2 TB/s) drains a 2 MiB in+out pair in ~1.3 us, so the fixed
    # ~0.35 us/step overhead hurts relatively more there -> bigger blocks.
    # 2 MiB already reaches ~85%+ of the HBM roofline on v5e/v6e.
    try:
        kind = jax.devices()[0].device_kind.lower()
    except Exception:
        return 2 << 20
    if "7" in kind:
        return 4 << 20
    return 2 << 20


def scale_layer(x, scale, *, target_tile_bytes=None):
    """y = scale * x, with scale broadcast over the last axis of x."""
    orig_shape = x.shape
    F = x.shape[-1]
    if scale.ndim != 1:
        scale = scale.reshape(-1)
    if scale.shape[0] == 1 and F != 1:
        # torch broadcasting for the default num_features=1 constructor.
        scale = jnp.broadcast_to(scale, (F,))
    assert scale.shape[0] == F, "last dim of x must equal num_features"

    out_dtype = jnp.result_type(x.dtype, scale.dtype)  # torch promotion semantics
    xb = jnp.dtype(x.dtype).itemsize
    ob = jnp.dtype(out_dtype).itemsize

    if x.size == 0:
        return (x * scale.astype(out_dtype)).astype(out_dtype)

    if target_tile_bytes is None:
        target_tile_bytes = _default_tile_bytes()

    # Sublane packing of the narrower streamed dtype: 8 rows for 32-bit,
    # 16 for bf16, 32 for int8.
    sub = max(8, 32 // min(xb, ob))

    x2d = x.reshape(-1, F)
    M = x2d.shape[0]

    # Lane-dense fold, only when it costs nothing (no pad pass) and the minimum
    # block (sub rows, 2 in + 2 out buffers) stays far inside v5e's 16 MiB
    # default scoped VMEM.
    k = 128 // math.gcd(F, 128)
    if k > 1 and (M % k != 0 or 2 * sub * (k * F) * (xb + ob) > (12 << 20)):
        k = 1
    L = k * F
    R = M // k

    xf = x2d.reshape(R, L)
    scale_f = jnp.tile(scale.astype(out_dtype), k).reshape(1, L)

    # Row tile: sized purely from the byte target (no hard row cap).
    dbytes = max(xb, ob)
    tm = max(sub, (target_tile_bytes // (L * dbytes)) // sub * sub)

    steps = pl.cdiv(R, tm)
    if steps < 2 and R >= 2 * sub:
        # Ensure >= 2 blocks so the "parallel" row axis can split across both
        # TensorCores on v7x megacore.
        tm = _round_up(pl.cdiv(R, 2), sub)
        steps = pl.cdiv(R, tm)
    if steps <= 1:
        # Single block: make it exactly the array extent (a block dim equal to
        # the full array dim is always legal, even when not a multiple of 8).
        tm = R
        steps = 1
    grid = (steps,)

    # Explicit scoped-VMEM request: 2 in + 2 out buffers + resident scale,
    # plus headroom; capped so it fits v7x's 64 MiB physical VMEM.
    vmem_need = 2 * tm * L * xb + 2 * tm * L * ob + 2 * L * ob
    vmem_limit = int(min(48 << 20, max(16 << 20, vmem_need + (4 << 20))))
    if vmem_need > (48 << 20):
        # Pathological case: a single lane-row is wider than VMEM allows.
        # TODO(synk): add lane-dim tiling for rows wider than VMEM; plain JAX
        # fallback keeps semantics correct meanwhile.
        return (x * scale.astype(out_dtype)).astype(out_dtype)

    cost = pl.CostEstimate(
        flops=M * F,
        transcendentals=0,
        bytes_accessed=M * F * (xb + ob) + L * ob,
    )

    out = pl.pallas_call(
        _scale_kernel,
        out_shape=jax.ShapeDtypeStruct((R, L), out_dtype),
        grid_spec=pltpu.PrefetchScalarGridSpec(
            num_scalar_prefetch=0,
            grid=grid,
            in_specs=[
                # Constant index_map: DMA'd once, stays VMEM-resident across steps.
                pl.BlockSpec((1, L), lambda i: (0, 0)),
                # Streamed x row tile (default double buffering; on this
                # streaming HBM-bound op extra buffers add nothing).
                pl.BlockSpec((tm, L), lambda i: (i, 0)),
            ],
            out_specs=pl.BlockSpec((tm, L), lambda i: (i, 0)),
        ),
        compiler_params=pltpu.CompilerParams(
            dimension_semantics=("parallel",),
            vmem_limit_bytes=vmem_limit,
        ),
        cost_estimate=cost,
    )(scale_f, xf)

    return out.reshape(orig_shape)


if __name__ == "__main__":
    key = jax.random.PRNGKey(0)

    # ScaleLayer(ratio=1.5, num_features=32): scale = ones(32) * 1.5
    ratio = 1.5
    B, S, F = 2, 8, 32
    scale = jnp.ones((F,), dtype=jnp.float32) * ratio
    x = jax.random.normal(key, (B, S, F), dtype=jnp.float32)

    y = scale_layer(x, scale)
    jax.block_until_ready(y)

    y_ref = scale * x
    assert y.shape == x.shape and y.dtype == y_ref.dtype
    assert jnp.allclose(y, y_ref, atol=1e-6), "mismatch vs reference"

    # Ragged shape (F not a multiple of 128, row count not a multiple of the
    # sublane packing) exercises the no-pad / full-dim-block path.
    x2 = jax.random.normal(jax.random.PRNGKey(1), (3, 5, 6), dtype=jnp.float32)
    scale2 = jnp.linspace(0.5, 2.0, 6, dtype=jnp.float32)
    y2 = scale_layer(x2, scale2)
    jax.block_until_ready(y2)
    assert jnp.allclose(y2, scale2 * x2, atol=1e-6), "mismatch vs reference (ragged)"

    print("KERNEL_OK")
</pallas_src>

<mosaic_0001>
module attributes {stable_mosaic.version = 11 : i64} {
  func.func @_scale_kernel(%arg0: i32, %arg1: memref<1x128xf32, #tpu.memory_space<vmem>>, %arg2: memref<4x128xf32, #tpu.memory_space<vmem>>, %arg3: memref<4x128xf32, #tpu.memory_space<vmem>>) attributes {dimension_semantics = [#tpu.dimension_semantics<parallel>], iteration_bounds = array<i64: 1>, scalar_prefetch = 0 : i64, scratch_operands = 0 : i64, tpu.core_type = #tpu.core_type<tc>, window_params = [{pipeline_mode = #tpu.pipeline_mode<synchronous>, transform_indices = @transform_0, window_bounds = array<i64: 1, 128>}, {transform_indices = @transform_1, window_bounds = array<i64: 4, 128>}, {transform_indices = @transform_2, window_bounds = array<i64: 4, 128>}]} {
    %c0 = arith.constant 0 : index
    %c0_0 = arith.constant 0 : index
    %0 = vector.load %arg2[%c0, %c0_0] : memref<4x128xf32, #tpu.memory_space<vmem>>, vector<4x128xf32>
    %c0_1 = arith.constant 0 : index
    %c0_2 = arith.constant 0 : index
    %1 = vector.load %arg1[%c0_1, %c0_2] : memref<1x128xf32, #tpu.memory_space<vmem>>, vector<1x128xf32>
    %2 = vector.broadcast %1 : vector<1x128xf32> to vector<4x128xf32>
    %3 = arith.mulf %0, %2 : vector<4x128xf32>
    %c0_3 = arith.constant 0 : index
    %c0_4 = arith.constant 0 : index
    %4 = vector.load %arg3[%c0_3, %c0_4] : memref<4x128xf32, #tpu.memory_space<vmem>>, vector<4x128xf32>
    tpu.vector_store %arg3[%c0_3, %c0_4], %3 {strides = array<i32>} : memref<4x128xf32, #tpu.memory_space<vmem>>, vector<4x128xf32>,
    return
  }
  func.func @transform_0(%arg0: i32) -> (i32, i32) {
    %c0_i32 = arith.constant 0 : i32
    %c0_i32_0 = arith.constant 0 : i32
    %c0_i32_1 = arith.constant 0 : i32
    return %c0_i32, %c0_i32_0 : i32, i32
  }
  func.func @transform_1(%arg0: i32) -> (i32, i32) {
    %c0_i32 = arith.constant 0 : i32
    %c0_i32_0 = arith.constant 0 : i32
    return %arg0, %c0_i32 : i32, i32
  }
  func.func @transform_2(%arg0: i32) -> (i32, i32) {
    %c0_i32 = arith.constant 0 : i32
    %c0_i32_0 = arith.constant 0 : i32
    return %arg0, %c0_i32 : i32, i32
  }
}

</mosaic_0001>

<llo_original>
// kernel: tpu_custom_call.1
$region0: #{tpu_custom_call.1}
  #allocation0 [shape = 'u32[]', space=smem, size = 0x4, offset = 0x4, fixed_abs, tag = 'smem constant byte address 0x4 - core index']
  #allocation1 [shape = 'u32[144,128]{1,0:T(1,128)}', space=vmem, size = 0x12000, scoped, tag = 'internal scratch']
  %s0 = inlined_call_operand.hbm [shape: f32[1,128], index: 0, kind: input, shape index: {}]
  %s1 = inlined_call_operand.hbm [shape: f32[4,128], index: 1, kind: input, shape index: {}]
  %s2 = inlined_call_operand.hbm [shape: f32[4,128], index: 2, kind: output, shape index: {}]
  %s3 = sld [smem:[#allocation0]]
  $region26: #{tpu_custom_call.1} parent=0
    _
  %s5 = ssub.s32 1, %s3
  %s6 = scalar_select 0, %s5, %s3
  $region1: #{tpu_custom_call.1} parent=0
    #allocation2 [shape = 'u8[512]{0}', space=vmem, size = 0x400, scoped, tag = 'input window, operand 0, single buffered']
    #allocation3 [shape = 's32[1]{0}', space=sflag, size = 0x4, scoped, tag = 'scoped memory for tpu_custom_call.1']
    #allocation4 [shape = 's32[1]{0}', space=sflag, size = 0x4, scoped, tag = 'scoped memory for tpu_custom_call.1']
    #allocation5 [shape = 'u8[2048]{0}', space=vmem, size = 0x800, scoped, tag = 'input window, operand 1, single buffered']
    #allocation6 [shape = 's32[1]{0}', space=sflag, size = 0x4, scoped, tag = 'scoped memory for tpu_custom_call.1']
    #allocation7 [shape = 'u8[2048]{0}', space=vmem, size = 0x800, scoped, tag = 'output window, operand 0, single buffered']
    %7 = vsyncpa [#allocation3], 0
    %8 = vsyncpa [#allocation6], 0
    %9 = vsyncpa [#allocation4], 0
    // Predicated region
    $region2: #{tpu_custom_call.1} parent=1 // pred_check
      _
    $region3: #{tpu_custom_call.1} parent=1 // pred_check_branch
      %11 = sbr.rel (0) target = $region5
    $region4: #{tpu_custom_call.1} parent=1 // pred_region
      %s13 = ssub.s32 16, 16
      %14 = vsyncadd [#allocation3], %s13
      %s16 = sshll.u32 [#allocation2], 4
      %s17 = int_to_ptr.vmem [resolvable:$true] %s16
      %19 = dma.hbm_to_vmem [thread:$0]  %s0, 16, %s17, [#allocation3]
    $region5: #{tpu_custom_call.1} parent=1 // pred_fallthru
      _
    // Predicated region
    $region6: #{tpu_custom_call.1} parent=1 // pred_check
      _
    $region7: #{tpu_custom_call.1} parent=1 // pred_check_branch
      %21 = sbr.rel (0) target = $region9
    $region8: #{tpu_custom_call.1} parent=1 // pred_region
      %s23 = ssub.s32 64, 64
      %24 = vsyncadd [#allocation6], %s23
      %s26 = sshll.u32 [#allocation5], 4
      %s27 = int_to_ptr.vmem [resolvable:$true] %s26
      %29 = dma.hbm_to_vmem [thread:$0]  %s1, 64, %s27, [#allocation6]
    $region9: #{tpu_custom_call.1} parent=1 // pred_fallthru
      _
    // Predicated region
    $region10: #{tpu_custom_call.1} parent=1 // pred_check
      _
    $region11: #{tpu_custom_call.1} parent=1 // pred_check_branch
      %31 = sbr.rel (0) target = $region13
    $region12: #{tpu_custom_call.1} parent=1 // pred_region
      %32 = dma.done [#allocation3], 16
    $region13: #{tpu_custom_call.1} parent=1 // pred_fallthru
      _
    // Predicated region
    $region14: #{tpu_custom_call.1} parent=1 // pred_check
      _
    $region15: #{tpu_custom_call.1} parent=1 // pred_check_branch
      %34 = sbr.rel (0) target = $region17
    $region16: #{tpu_custom_call.1} parent=1 // pred_region
      %35 = dma.done [#allocation6], 64
    $region17: #{tpu_custom_call.1} parent=1 // pred_fallthru
      _
    %v36 = vld [vmem:[#allocation5] sm:$0xf]
    %v37 = vld [vmem:[#allocation2] sm:$0x1]
    %v39 = vlaneseq
    %v40 = vshrl.u32 %v39, 7
    %v41 = vsub.s32 0, %v40
    %v42 = vrot.slane %v37, %v41
    %v44 = vmul.f32 %v36, %v42
    %45 = vst [vmem:[#allocation7] sm:$0xf] %v44
    // Predicated region
    $region18: #{tpu_custom_call.1} parent=1 // pred_check
      _
    $region19: #{tpu_custom_call.1} parent=1 // pred_check_branch
      %47 = sbr.rel (0) target = $region21
    $region20: #{tpu_custom_call.1} parent=1 // pred_region
      %s49 = ssub.s32 64, 64
      %50 = vsyncadd [#allocation4], %s49
      %s52 = sshll.u32 [#allocation7], 4
      %s53 = int_to_ptr.vmem [resolvable:$true] %s52
      %55 = dma.vmem_to_hbm [thread:$0]  %s53, 64, %s2, [#allocation4]
    $region21: #{tpu_custom_call.1} parent=1 // pred_fallthru
      _
    // Predicated region
    $region22: #{tpu_custom_call.1} parent=1 // pred_check
      _
    $region23: #{tpu_custom_call.1} parent=1 // pred_check_branch
      %57 = sbr.rel (0) target = $region25
    $region24: #{tpu_custom_call.1} parent=1 // pred_region
      %58 = dma.done [#allocation4], 64
    $region25: #{tpu_custom_call.1} parent=1 // pred_fallthru
      _
    %59 = vsyncpa [#allocation3], 1
    %60 = vsyncpa [#allocation6], 1
    %61 = vsyncpa [#allocation4], 1

</llo_original>
